<compile_context>
chip_gen: v7x
topology: tpu7x:2x2x1
jax: 0.10.0
libtpu: 0.0.40
codegen_flags: <defaults>
</compile_context>

<pallas_src>
import jax
import jax.numpy as jnp
from jax.experimental import pallas as pl
from jax.experimental.pallas import tpu as pltpu


def _round_up(x, m):
    return (x + m - 1) // m * m


_POOL_CHUNK = 8  # HW rows converted/accumulated per step; bounds the f32 temp to chunk*TB*C*4 B


def _encoder_head_kernel(x_ref, w_ref, b_ref, o_ref):
    """Fused global-average-pool + flatten + Linear for a tile of TB images.

    x_ref: (HW, TB, C) bf16 backbone features; HW leads so pooling is leading-axis vreg adds
           and the pooled (TB, C) result lands directly in MXU-LHS layout.
    w_ref: (C, E_pad) bf16 embed weight, pre-transposed, pre-scaled by 1/HW, zero-padded in E.
    b_ref: (1, E_pad) f32 embed bias, zero-padded in E.
    o_ref: (TB, E_pad) lane-dense output slab.
    """
    hw, tb, c = x_ref.shape
    # AdaptiveAvgPool2d((1,1)) + view: chunked f32 accumulation over the leading HW axis.
    # Converting only a (chunk, TB, C) slab at a time avoids materializing a full f32 copy of
    # the bf16 block (which would double VMEM pressure); the 1/HW scale lives in w_ref.
    pooled = jnp.zeros((tb, c), jnp.float32)
    for s in range(0, hw, _POOL_CHUNK):
        n = min(_POOL_CHUNK, hw - s)
        pooled = pooled + jnp.sum(x_ref[s:s + n], axis=0, dtype=jnp.float32)
    # Single-pass bf16 MXU matmul with f32 accumulation (deterministic across v5e/v6e/v7x).
    y = jnp.dot(pooled.astype(w_ref.dtype), w_ref[...],
                preferred_element_type=jnp.float32)
    o_ref[...] = (y + b_ref[...]).astype(o_ref.dtype)


def _hw_budgets():
    """(vmem_limit_bytes, target_block_bytes), generation-aware.

    v5e/v6e have 128 MiB VMEM per TensorCore -> use big blocks to amortize per-step overhead and
    sit on the HBM roofline; v7x has only 64 MiB physical -> keep the previous conservative caps.
    """
    try:
        cap = int(pltpu.get_tpu_info().vmem_capacity_bytes)
    except Exception:
        cap = 64 << 20  # be conservative (v7x-safe) if the query is unavailable
    if cap >= (100 << 20):          # v5e / v6e
        return 96 << 20, 20 << 20
    return 48 << 20, 12 << 20       # v7x


def _pick_batch_tile(B, HW, C, dtype_bytes, target_block_bytes, min_grid_steps=2):
    """Largest batch tile that (a) keeps the double-buffered input block inside the VMEM budget
    and (b) leaves at least `min_grid_steps` grid steps so the 'parallel' batch axis can shard
    across both TensorCores (v7x) and the DMA/compute pipeline has work to overlap."""
    per_image = max(1, HW * C * dtype_bytes)
    tb_mem = max(8, (target_block_bytes // per_image) // 8 * 8)
    tb_split = max(8, _round_up(pl.cdiv(B, min_grid_steps), 8))
    return min(tb_mem, tb_split, _round_up(B, 8))


def encoder_cnn_head(features_hwbc, w_embed_scaled, b_embed_pad, *, batch_tile=None,
                     out_dtype=jnp.float32):
    """Native entry point.

    features_hwbc: (HW, B, C) bf16 backbone features (C lane-dense, B on sublanes).
    w_embed_scaled: (C, E_pad) bf16, pre-scaled by 1/HW.  b_embed_pad: (1, E_pad) f32.
    Returns (B, E_pad); caller slices off the E padding.
    """
    HW, B, C = features_hwbc.shape
    E_pad = w_embed_scaled.shape[1]
    vmem_limit, target_block = _hw_budgets()
    tb = batch_tile if batch_tile is not None else _pick_batch_tile(
        B, HW, C, features_hwbc.dtype.itemsize, target_block)
    grid = (pl.cdiv(B, tb),)

    cost = pl.CostEstimate(
        flops=2 * B * C * E_pad + B * HW * C,
        transcendentals=0,
        bytes_accessed=(B * HW * C * features_hwbc.dtype.itemsize
                        + C * E_pad * w_embed_scaled.dtype.itemsize
                        + B * E_pad * 4),
    )

    return pl.pallas_call(
        _encoder_head_kernel,
        out_shape=jax.ShapeDtypeStruct((B, E_pad), out_dtype),
        grid_spec=pltpu.PrefetchScalarGridSpec(
            num_scalar_prefetch=0,
            grid=grid,
            in_specs=[
                # Streamed feature tiles (default 2-deep pipelining: for a pure HBM-bound stream a
                # bigger block beats a third buffer, especially under v7x's 64 MiB VMEM).
                pl.BlockSpec((HW, tb, C), lambda i: (0, i, 0)),
                # Grid-invariant embed weight / bias (small after the bf16 cast).
                pl.BlockSpec((C, E_pad), lambda i: (0, 0)),
                pl.BlockSpec((1, E_pad), lambda i: (0, 0)),
            ],
            out_specs=pl.BlockSpec((tb, E_pad), lambda i: (i, 0)),
        ),
        compiler_params=pltpu.CompilerParams(
            dimension_semantics=("parallel",),   # batch tiles split across TensorCores (v7x)
            vmem_limit_bytes=vmem_limit,
        ),
        cost_estimate=cost,
    )(features_hwbc, w_embed_scaled, b_embed_pad)


def prepare_embed_params(w_embed_pt, b_embed, hw):
    """One-time parameter prep (hoist outside the per-call path in production): transpose the
    PyTorch (E, C) Linear weight to (C, E), fold the 1/HW avg-pool scale into it, zero-pad E up
    to a 128-lane multiple (lane-dense output slab), and store the weight in bf16 for a
    single-pass MXU matmul with half the resident VMEM / HBM bytes."""
    E, C = w_embed_pt.shape
    E_pad = _round_up(E, 128)
    w = w_embed_pt.T.astype(jnp.float32) / float(hw)
    w = jnp.pad(w, ((0, 0), (0, E_pad - E))).astype(jnp.bfloat16)
    b = jnp.pad(b_embed.astype(jnp.float32), (0, E_pad - E)).reshape(1, E_pad)
    return w, b


def encoder_cnn_forward(features_nchw, w_embed_pt, b_embed, *, batch_tile=None,
                        feature_dtype=jnp.bfloat16):
    """Mirrors EncoderCNN.forward given the ResNet-50 backbone's pre-avgpool feature map (NCHW).

    w_embed_pt follows the PyTorch nn.Linear convention (embed_size, in_features): y = x@W.T + b.
    NOTE: the NCHW -> (HW, B, C) transpose + f32 -> bf16 cast below is one-time glue for a
    PyTorch-layout input; a real TPU pipeline should have the backbone emit bf16 channels-last
    features and call encoder_cnn_head directly, removing this extra HBM read/write pass.
    """
    B, C, H, W = features_nchw.shape
    E = w_embed_pt.shape[0]
    HW = H * W
    x = jnp.transpose(features_nchw, (2, 3, 0, 1)).reshape(HW, B, C).astype(feature_dtype)
    w_scaled, b_pad = prepare_embed_params(w_embed_pt, b_embed, HW)
    out = encoder_cnn_head(x, w_scaled, b_pad, batch_tile=batch_tile)
    return out[:, :E]


if __name__ == "__main__":
    # Small synthetic stand-in for the ResNet-50 pre-avgpool feature map
    # (real shapes would be C=2048, H=W=7, larger B).
    B, C, H, W = 16, 256, 8, 8
    EMBED = 32

    key = jax.random.PRNGKey(0)
    k_feat, k_w, k_b = jax.random.split(key, 3)

    features = jax.random.normal(k_feat, (B, C, H, W), dtype=jnp.float32)
    w_embed = 0.02 * jax.random.normal(k_w, (EMBED, C), dtype=jnp.float32)  # PyTorch Linear layout
    b_embed = 0.02 * jax.random.normal(k_b, (EMBED,), dtype=jnp.float32)

    # Auto batch tile -> capped so the grid has >= 2 steps (both TCs on v7x, pipelined DMA).
    out = encoder_cnn_forward(features, w_embed, b_embed)
    out = jax.block_until_ready(out)

    # Reference for the same forward tail (avgpool -> flatten -> linear), mirroring the kernel's
    # quantization points: bf16 features, f32 pooled sums, bf16 pooled LHS, bf16 pre-scaled
    # weight, f32 accumulation.
    HW = H * W
    feats_q = features.astype(jnp.bfloat16).astype(jnp.float32)
    pooled_sum = feats_q.sum(axis=(2, 3))                                   # (B, C) f32
    pooled_q = pooled_sum.astype(jnp.bfloat16).astype(jnp.float32)
    w_q = (w_embed.T.astype(jnp.float32) / HW).astype(jnp.bfloat16).astype(jnp.float32)
    ref = pooled_q @ w_q + b_embed

    assert out.shape == (B, EMBED)
    # Tolerance sized for the bf16 MXU path: a pooled sum landing on a bf16 rounding boundary can
    # round differently between the kernel's chunked f32 accumulation and XLA's reduction order
    # (worst case ~2.5e-3 on one output element); genuine bugs (scale, transpose, bias) are >=1e-2.
    max_err = float(jnp.max(jnp.abs(out - ref)))
    assert jnp.allclose(out, ref, atol=5e-3, rtol=0.0), (
        f"kernel mismatch vs reference: max abs err = {max_err}")

    print("KERNEL_OK")
</pallas_src>

<mosaic_0001>
module attributes {stable_mosaic.version = 11 : i64} {
  func.func @_encoder_head_kernel(%arg0: i32, %arg1: memref<64x8x256xbf16, #tpu.memory_space<vmem>>, %arg2: memref<256x128xbf16, #tpu.memory_space<vmem>>, %arg3: memref<1x128xf32, #tpu.memory_space<vmem>>, %arg4: memref<8x128xf32, #tpu.memory_space<vmem>>) attributes {dimension_semantics = [#tpu.dimension_semantics<parallel>], iteration_bounds = array<i64: 2>, scalar_prefetch = 0 : i64, scratch_operands = 0 : i64, tpu.core_type = #tpu.core_type<tc>, window_params = [{transform_indices = @transform_0, window_bounds = array<i64: 64, 8, 256>}, {pipeline_mode = #tpu.pipeline_mode<synchronous>, transform_indices = @transform_1, window_bounds = array<i64: 256, 128>}, {pipeline_mode = #tpu.pipeline_mode<synchronous>, transform_indices = @transform_2, window_bounds = array<i64: 1, 128>}, {transform_indices = @transform_3, window_bounds = array<i64: 8, 128>}]} {
    %cst = arith.constant 0.000000e+00 : f32
    %0 = vector.broadcast %cst : f32 to vector<8x256xf32>
    %c0 = arith.constant 0 : index
    %c0_0 = arith.constant 0 : index
    %c0_1 = arith.constant 0 : index
    %1 = vector.load %arg1[%c0, %c0_0, %c0_1] : memref<64x8x256xbf16, #tpu.memory_space<vmem>>, vector<8x8x256xbf16>
    %2 = arith.extf %1 : vector<8x8x256xbf16> to vector<8x8x256xf32>
    %cst_2 = arith.constant dense<0.000000e+00> : vector<8x256xf32>
    %3 = vector.multi_reduction <add>, %2, %cst_2 [0] : vector<8x8x256xf32> to vector<8x256xf32>
    %4 = arith.addf %0, %3 : vector<8x256xf32>
    %c8 = arith.constant 8 : index
    %c0_3 = arith.constant 0 : index
    %c0_4 = arith.constant 0 : index
    %5 = vector.load %arg1[%c8, %c0_3, %c0_4] : memref<64x8x256xbf16, #tpu.memory_space<vmem>>, vector<8x8x256xbf16>
    %6 = arith.extf %5 : vector<8x8x256xbf16> to vector<8x8x256xf32>
    %cst_5 = arith.constant dense<0.000000e+00> : vector<8x256xf32>
    %7 = vector.multi_reduction <add>, %6, %cst_5 [0] : vector<8x8x256xf32> to vector<8x256xf32>
    %8 = arith.addf %4, %7 : vector<8x256xf32>
    %c16 = arith.constant 16 : index
    %c0_6 = arith.constant 0 : index
    %c0_7 = arith.constant 0 : index
    %9 = vector.load %arg1[%c16, %c0_6, %c0_7] : memref<64x8x256xbf16, #tpu.memory_space<vmem>>, vector<8x8x256xbf16>
    %10 = arith.extf %9 : vector<8x8x256xbf16> to vector<8x8x256xf32>
    %cst_8 = arith.constant dense<0.000000e+00> : vector<8x256xf32>
    %11 = vector.multi_reduction <add>, %10, %cst_8 [0] : vector<8x8x256xf32> to vector<8x256xf32>
    %12 = arith.addf %8, %11 : vector<8x256xf32>
    %c24 = arith.constant 24 : index
    %c0_9 = arith.constant 0 : index
    %c0_10 = arith.constant 0 : index
    %13 = vector.load %arg1[%c24, %c0_9, %c0_10] : memref<64x8x256xbf16, #tpu.memory_space<vmem>>, vector<8x8x256xbf16>
    %14 = arith.extf %13 : vector<8x8x256xbf16> to vector<8x8x256xf32>
    %cst_11 = arith.constant dense<0.000000e+00> : vector<8x256xf32>
    %15 = vector.multi_reduction <add>, %14, %cst_11 [0] : vector<8x8x256xf32> to vector<8x256xf32>
    %16 = arith.addf %12, %15 : vector<8x256xf32>
    %c32 = arith.constant 32 : index
    %c0_12 = arith.constant 0 : index
    %c0_13 = arith.constant 0 : index
    %17 = vector.load %arg1[%c32, %c0_12, %c0_13] : memref<64x8x256xbf16, #tpu.memory_space<vmem>>, vector<8x8x256xbf16>
    %18 = arith.extf %17 : vector<8x8x256xbf16> to vector<8x8x256xf32>
    %cst_14 = arith.constant dense<0.000000e+00> : vector<8x256xf32>
    %19 = vector.multi_reduction <add>, %18, %cst_14 [0] : vector<8x8x256xf32> to vector<8x256xf32>
    %20 = arith.addf %16, %19 : vector<8x256xf32>
    %c40 = arith.constant 40 : index
    %c0_15 = arith.constant 0 : index
    %c0_16 = arith.constant 0 : index
    %21 = vector.load %arg1[%c40, %c0_15, %c0_16] : memref<64x8x256xbf16, #tpu.memory_space<vmem>>, vector<8x8x256xbf16>
    %22 = arith.extf %21 : vector<8x8x256xbf16> to vector<8x8x256xf32>
    %cst_17 = arith.constant dense<0.000000e+00> : vector<8x256xf32>
    %23 = vector.multi_reduction <add>, %22, %cst_17 [0] : vector<8x8x256xf32> to vector<8x256xf32>
    %24 = arith.addf %20, %23 : vector<8x256xf32>
    %c48 = arith.constant 48 : index
    %c0_18 = arith.constant 0 : index
    %c0_19 = arith.constant 0 : index
    %25 = vector.load %arg1[%c48, %c0_18, %c0_19] : memref<64x8x256xbf16, #tpu.memory_space<vmem>>, vector<8x8x256xbf16>
    %26 = arith.extf %25 : vector<8x8x256xbf16> to vector<8x8x256xf32>
    %cst_20 = arith.constant dense<0.000000e+00> : vector<8x256xf32>
    %27 = vector.multi_reduction <add>, %26, %cst_20 [0] : vector<8x8x256xf32> to vector<8x256xf32>
    %28 = arith.addf %24, %27 : vector<8x256xf32>
    %c56 = arith.constant 56 : index
    %c0_21 = arith.constant 0 : index
    %c0_22 = arith.constant 0 : index
    %29 = vector.load %arg1[%c56, %c0_21, %c0_22] : memref<64x8x256xbf16, #tpu.memory_space<vmem>>, vector<8x8x256xbf16>
    %30 = arith.extf %29 : vector<8x8x256xbf16> to vector<8x8x256xf32>
    %cst_23 = arith.constant dense<0.000000e+00> : vector<8x256xf32>
    %31 = vector.multi_reduction <add>, %30, %cst_23 [0] : vector<8x8x256xf32> to vector<8x256xf32>
    %32 = arith.addf %28, %31 : vector<8x256xf32>
    %33 = arith.truncf %32 : vector<8x256xf32> to vector<8x256xbf16>
    %c0_24 = arith.constant 0 : index
    %c0_25 = arith.constant 0 : index
    %34 = vector.load %arg2[%c0_24, %c0_25] : memref<256x128xbf16, #tpu.memory_space<vmem>>, vector<256x128xbf16>
    %cst_26 = arith.constant dense<0.000000e+00> : vector<8x128xf32>
    %35 = tpu.matmul %33, %34, %cst_26 {dimension_numbers = #tpu.dot_dimension_numbers<[1], [0], [0], [1], [0, 0, 1, 1], [], []>} : vector<8x256xbf16>, vector<256x128xbf16>, vector<8x128xf32> -> vector<8x128xf32>
    %c0_27 = arith.constant 0 : index
    %c0_28 = arith.constant 0 : index
    %36 = vector.load %arg3[%c0_27, %c0_28] : memref<1x128xf32, #tpu.memory_space<vmem>>, vector<1x128xf32>
    %37 = vector.broadcast %36 : vector<1x128xf32> to vector<8x128xf32>
    %38 = arith.addf %35, %37 : vector<8x128xf32>
    %c0_29 = arith.constant 0 : index
    %c0_30 = arith.constant 0 : index
    %39 = vector.load %arg4[%c0_29, %c0_30] : memref<8x128xf32, #tpu.memory_space<vmem>>, vector<8x128xf32>
    tpu.vector_store %arg4[%c0_29, %c0_30], %38 {strides = array<i32>} : memref<8x128xf32, #tpu.memory_space<vmem>>, vector<8x128xf32>,
    return
  }
  func.func @transform_0(%arg0: i32) -> (i32, i32, i32) {
    %c0_i32 = arith.constant 0 : i32
    %c0_i32_0 = arith.constant 0 : i32
    %c0_i32_1 = arith.constant 0 : i32
    return %c0_i32, %arg0, %c0_i32_0 : i32, i32, i32
  }
  func.func @transform_1(%arg0: i32) -> (i32, i32) {
    %c0_i32 = arith.constant 0 : i32
    %c0_i32_0 = arith.constant 0 : i32
    %c0_i32_1 = arith.constant 0 : i32
    return %c0_i32, %c0_i32_0 : i32, i32
  }
  func.func @transform_2(%arg0: i32) -> (i32, i32) {
    %c0_i32 = arith.constant 0 : i32
    %c0_i32_0 = arith.constant 0 : i32
    %c0_i32_1 = arith.constant 0 : i32
    return %c0_i32, %c0_i32_0 : i32, i32
  }
  func.func @transform_3(%arg0: i32) -> (i32, i32) {
    %c0_i32 = arith.constant 0 : i32
    %c0_i32_0 = arith.constant 0 : i32
    return %arg0, %c0_i32 : i32, i32
  }
}

</mosaic_0001>

<llo_original>
// kernel: tpu_custom_call.1
$region0: #{tpu_custom_call.1}
  #allocation0 [shape = 'u32[]', space=smem, size = 0x4, offset = 0x4, fixed_abs, tag = 'smem constant byte address 0x4 - core index']
  #allocation1 [shape = 'u32[144,128]{1,0:T(1,128)}', space=vmem, size = 0x12000, scoped, tag = 'internal scratch']
  %s0 = inlined_call_operand.hbm [shape: bf16[64,16,256], index: 0, kind: input, shape index: {}]
  %s1 = inlined_call_operand.hbm [shape: bf16[256,128], index: 1, kind: input, shape index: {}]
  %s2 = inlined_call_operand.vmem [shape: f32[1,128], index: 2, kind: input, shape index: {}]
  %s3 = inlined_call_operand.hbm [shape: f32[16,128], index: 3, kind: output, shape index: {}]
  %s4 = sld [smem:[#allocation0]]
  $region53: #{tpu_custom_call.1} parent=0
    _
  %s6 = ssub.s32 1, %s4
  %s7 = scalar_select 0, %s6, %s4
  $region1: #{tpu_custom_call.1} parent=0
    #allocation2 [shape = 'u8[524288]{0}', space=vmem, size = 0x80000, scoped, tag = 'input window, operand 0']
    #allocation3 [shape = 's32[2]{0}', space=sflag, size = 0x8, scoped, tag = 'scoped memory for tpu_custom_call.1']
    #allocation4 [shape = 's32[2]{0}', space=sflag, size = 0x8, scoped, tag = 'scoped memory for tpu_custom_call.1']
    #allocation5 [shape = 'u8[65536]{0}', space=vmem, size = 0x10000, scoped, tag = 'input window, operand 1, single buffered']
    #allocation6 [shape = 's32[1]{0}', space=sflag, size = 0x4, scoped, tag = 'scoped memory for tpu_custom_call.1']
    #allocation7 [shape = 'u8[8192]{0}', space=vmem, size = 0x2000, scoped, tag = 'output window, operand 0']
    %8 = vsyncpa [#allocation3], 0
    %s9 = scalar_lea.sflag [#allocation3], 1
    %10 = vsyncpa %s9, 0
    %11 = vsyncpa [#allocation6], 0
    %12 = vsyncpa [#allocation4], 0
    %s13 = scalar_lea.sflag [#allocation4], 1
    %14 = vsyncpa %s13, 0
    loop: start=0, step=1, limit=4
    $region2: #{tpu_custom_call.1} parent=1 // loop_pre_header
      _
    $region3: #{tpu_custom_call.1} parent=1 // loop_header
      %s16 = sphi 0, %s20
      %p17 = scmp.ge.s32.totalorder %s16, 4
      %s26 = sphi 0, %s28
      %s29 = sphi 0, %s26
      %s30 = sphi 0, %s29
      %s46 = sphi 0, %s30
      %s50 = sphi 0, %s50
      %s52 = sphi 0, %s50
      %s53 = sphi 0, %s52
      %s67 = sphi 0, %s53
      %s71 = sphi 0, %s71
      %s73 = sphi 0, %s71
      %s74 = sphi 0, %s73
      %s88 = sphi 0, %s74
      %s94 = sphi 0, %s96
      %s97 = sphi 0, %s94
      %s98 = sphi 0, %s97
      %s114 = sphi 0, %s98
    $region4: #{tpu_custom_call.1} parent=1 // loop_header_branch
      %19 = sbr.rel (%p17) target = $region8
    $region5: #{tpu_custom_call.1} parent=1 // loop_body
      %s21 = ssub.s32 %s16, 1
      %s22 = ssub.s32 %s16, 2
      %s23 = sadd.s32 %s16, 1
      %s24 = ssub.s32 %s16, %s23
      %p25 = scmp.eq.s32.totalorder %s24, 0
      %s27 = sadd.s32 %s26, 1
      %s28 = scalar_select %p25, %s26, %s27
      %p31 = pneg %p25
      %p32 = scmp.eq.s32.totalorder %s16, 1
      %p33 = por %p31, %p32
      %p34 = scmp.ne.s32.totalorder %s26, %s29
      %p35 = scmp.eq.s32.totalorder %s16, 0
      %p36 = por %p34, %p35
      %p37 = scmp.ne.s32.totalorder %s26, %s29
      %p38 = scmp.eq.s32.totalorder %s21, 1
      %p39 = por %p37, %p38
      %p40 = scmp.ne.s32.totalorder %s29, %s30
      %p41 = scmp.eq.s32.totalorder %s21, 0
      %p42 = por %p40, %p41
      %p43 = scmp.ne.s32.totalorder %s29, %s30
      %p44 = scmp.eq.s32.totalorder %s22, 1
      %p45 = por %p43, %p44
      %p47 = scmp.ne.s32.totalorder %s30, %s46
      %p48 = scmp.eq.s32.totalorder %s22, 0
      %p49 = por %p47, %p48
      %s51 = sadd.s32 %s50, 1
      %p54 = scmp.eq.s32.totalorder %s16, 1
      %p55 = scmp.ne.s32.totalorder %s50, %s52
      %p56 = scmp.eq.s32.totalorder %s16, 0
      %p57 = por %p55, %p56
      %p58 = scmp.ne.s32.totalorder %s50, %s52
      %p59 = scmp.eq.s32.totalorder %s21, 1
      %p60 = por %p58, %p59
      %p61 = scmp.ne.s32.totalorder %s52, %s53
      %p62 = scmp.eq.s32.totalorder %s21, 0
      %p63 = por %p61, %p62
      %p64 = scmp.ne.s32.totalorder %s52, %s53
      %p65 = scmp.eq.s32.totalorder %s22, 1
      %p66 = por %p64, %p65
      %p68 = scmp.ne.s32.totalorder %s53, %s67
      %p69 = scmp.eq.s32.totalorder %s22, 0
      %p70 = por %p68, %p69
      %s72 = sadd.s32 %s71, 1
      %p75 = scmp.eq.s32.totalorder %s16, 1
      %p76 = scmp.ne.s32.totalorder %s71, %s73
      %p77 = scmp.eq.s32.totalorder %s16, 0
      %p78 = por %p76, %p77
      %p79 = scmp.ne.s32.totalorder %s71, %s73
      %p80 = scmp.eq.s32.totalorder %s21, 1
      %p81 = por %p79, %p80
      %p82 = scmp.ne.s32.totalorder %s73, %s74
      %p83 = scmp.eq.s32.totalorder %s21, 0
      %p84 = por %p82, %p83
      %p85 = scmp.ne.s32.totalorder %s73, %s74
      %p86 = scmp.eq.s32.totalorder %s22, 1
      %p87 = por %p85, %p86
      %p89 = scmp.ne.s32.totalorder %s74, %s88
      %p90 = scmp.eq.s32.totalorder %s22, 0
      %p91 = por %p89, %p90
      %s92 = ssub.s32 %s16, %s23
      %p93 = scmp.eq.s32.totalorder %s92, 0
      %s95 = sadd.s32 %s94, 1
      %s96 = scalar_select %p93, %s94, %s95
      %p99 = pneg %p93
      %p100 = scmp.eq.s32.totalorder %s16, 1
      %p101 = por %p99, %p100
      %p102 = scmp.ne.s32.totalorder %s94, %s97
      %p103 = scmp.eq.s32.totalorder %s16, 0
      %p104 = por %p102, %p103
      %p105 = scmp.ne.s32.totalorder %s94, %s97
      %p106 = scmp.eq.s32.totalorder %s21, 1
      %p107 = por %p105, %p106
      %p108 = scmp.ne.s32.totalorder %s97, %s98
      %p109 = scmp.eq.s32.totalorder %s21, 0
      %p110 = por %p108, %p109
      %p111 = scmp.ne.s32.totalorder %s97, %s98
      %p112 = scmp.eq.s32.totalorder %s22, 1
      %p113 = por %p111, %p112
      %p115 = scmp.ne.s32.totalorder %s98, %s114
      %p116 = scmp.eq.s32.totalorder %s22, 0
      %p117 = por %p115, %p116
      %p118 = scmp.le.s32.totalorder 1, %s16
      %p119 = scmp.lt.s32.totalorder %s16, 3
      %p120 = pnand %p118, %p119
      %p121 = pneg %p120
      // Predicated region
      $region9: #{tpu_custom_call.1} parent=5 // pred_check
        _
      $region10: #{tpu_custom_call.1} parent=5 // pred_check_branch
        %123 = sbr.rel (%p120) target = $region12
      $region11: #{tpu_custom_call.1} parent=5 // pred_region
        %s124 = ssub.s32 %s16, 1
        // Predicated region
        $region13: #{tpu_custom_call.1} parent=11 // pred_check
          %p125 = pneg %p63
        $region14: #{tpu_custom_call.1} parent=11 // pred_check_branch
          %127 = sbr.rel (%p125) target = $region16
        $region15: #{tpu_custom_call.1} parent=11 // pred_region
          %s129 = ssub.s32 2048, 2048
          %130 = vsyncadd [#allocation6], %s129
          %s131 = sshll.u32 [#allocation5], 4
          %s132 = int_to_ptr.vmem [resolvable:$true] %s131
          %137 = dma.hbm_to_vmem [thread:$0]  %s1, 2048, %s132, [#allocation6], 64, 64, 4
        $region16: #{tpu_custom_call.1} parent=11 // pred_fallthru
          _
        // Predicated region
        $region17: #{tpu_custom_call.1} parent=11 // pred_check
          %p138 = pneg %p84
        $region18: #{tpu_custom_call.1} parent=11 // pred_check_branch
          %140 = sbr.rel (%p138) target = $region20
        $region19: #{tpu_custom_call.1} parent=11 // pred_region
          _
        $region20: #{tpu_custom_call.1} parent=11 // pred_fallthru
          _
      $region12: #{tpu_custom_call.1} parent=5 // pred_fallthru
        _
      %p141 = scmp.lt.s32.totalorder %s16, 2
      // Predicated region
      $region21: #{tpu_custom_call.1} parent=5 // pred_check
        %p142 = pneg %p141
      $region22: #{tpu_custom_call.1} parent=5 // pred_check_branch
        %144 = sbr.rel (%p142) target = $region24
      $region23: #{tpu_custom_call.1} parent=5 // pred_region
        // Predicated region
        $region25: #{tpu_custom_call.1} parent=23 // pred_check
          %p145 = pneg %p36
        $region26: #{tpu_custom_call.1} parent=23 // pred_check_branch
          %147 = sbr.rel (%p145) target = $region28
        $region27: #{tpu_custom_call.1} parent=23 // pred_region
          %s148 = sand.u32 %s26, 1
          %s149 = scalar_lea.sflag [#allocation3], %s148
          %s150 = sand.u32 %s26, 1
          %s151 = smul.addr %s150, 512
          %s152 = scalar_lea.vmem [#allocation2], %s151
          %s154 = ssub.s32 8192, 8192
          %155 = vsyncadd %s149, %s154
          %s156 = smul.addr %s16, 2
          %s157 = smul.addr %s156, 64
          %s158 = scalar_lea.hbm %s0, %s157
          %s159 = sshll.u32 %s152, 4
          %s160 = int_to_ptr.vmem [resolvable:$true] %s159
          %165 = dma.hbm_to_vmem [thread:$0]  %s158, 8192, %s160, %s149, 256, 128, 8
        $region28: #{tpu_custom_call.1} parent=23 // pred_fallthru
          _
      $region24: #{tpu_custom_call.1} parent=5 // pred_fallthru
        _
      %p166 = scmp.le.s32.totalorder 1, %s16
      %p167 = scmp.lt.s32.totalorder %s16, 3
      %p168 = pnand %p166, %p167
      %p169 = pneg %p168
      // Predicated region
      $region29: #{tpu_custom_call.1} parent=5 // pred_check
        _
      $region30: #{tpu_custom_call.1} parent=5 // pred_check_branch
        %171 = sbr.rel (%p168) target = $region32
      $region31: #{tpu_custom_call.1} parent=5 // pred_region
        %s172 = ssub.s32 %s16, 1
        %s173 = sand.u32 %s29, 1
        %s174 = scalar_lea.sflag [#allocation3], %s173
        %s175 = sand.u32 %s29, 1
        %s176 = smul.addr %s175, 512
        %s177 = scalar_lea.vmem [#allocation2], %s176
        // Predicated region
        $region33: #{tpu_custom_call.1} parent=31 // pred_check
          %p178 = pneg %p42
        $region34: #{tpu_custom_call.1} parent=31 // pred_check_branch
          %180 = sbr.rel (%p178) target = $region36
        $region35: #{tpu_custom_call.1} parent=31 // pred_region
          %181 = dma.done %s174, 8192
        $region36: #{tpu_custom_call.1} parent=31 // pred_fallthru
          _
        // Predicated region
        $region37: #{tpu_custom_call.1} parent=31 // pred_check
          %p182 = pneg %p63
        $region38: #{tpu_custom_call.1} parent=31 // pred_check_branch
          %184 = sbr.rel (%p182) target = $region40
        $region39: #{tpu_custom_call.1} parent=31 // pred_region
          %185 = dma.done [#allocation6], 2048
        $region40: #{tpu_custom_call.1} parent=31 // pred_fallthru
          _
        %s186 = sand.u32 %s29, 1
        %s187 = scalar_lea.sflag [#allocation3], %s186
        %s188 = sand.u32 %s29, 1
        %s189 = smul.addr %s188, 512
        %s190 = scalar_lea.vmem [#allocation2], %s189
        %p191 = pneg %p42
        %p192 = pneg %p39
        %p193 = pneg %p63
        %p194 = pneg %p60
        %p195 = pneg %p84
        %p196 = pneg %p81
        %p197 = pneg %p110
        %p198 = pneg %p107
        %s199 = sand.u32 %s97, 1
        %s200 = scalar_lea.sflag [#allocation4], %s199
        %s201 = sand.u32 %s97, 1
        %s202 = smul.addr %s201, 8
        %s203 = scalar_lea.vmem [#allocation7], %s202
        %v205 = vld [vmem:[%s177] sm:$0xff]
        %v206 = vld [vmem:[%s177 + $0x8] sm:$0xff]
        %v207 = vld [vmem:[%s177 + $0x10] sm:$0xff]
        %v208 = vld [vmem:[%s177 + $0x18] sm:$0xff]
        %v209 = vld [vmem:[%s177 + $0x20] sm:$0xff]
        %v210 = vld [vmem:[%s177 + $0x28] sm:$0xff]
        %v211 = vld [vmem:[%s177 + $0x30] sm:$0xff]
        %v212 = vld [vmem:[%s177 + $0x38] sm:$0xff]
        %v213 = vunpack.c.l.bf16 %v205
        %v214 = vunpack.c.h.bf16 %v205
        %v215 = vunpack.c.l.bf16 %v206
        %v216 = vunpack.c.h.bf16 %v206
        %v217 = vunpack.c.l.bf16 %v207
        %v218 = vunpack.c.h.bf16 %v207
        %v219 = vunpack.c.l.bf16 %v208
        %v220 = vunpack.c.h.bf16 %v208
        %v221 = vunpack.c.l.bf16 %v209
        %v222 = vunpack.c.h.bf16 %v209
        %v223 = vunpack.c.l.bf16 %v210
        %v224 = vunpack.c.h.bf16 %v210
        %v225 = vunpack.c.l.bf16 %v211
        %v226 = vunpack.c.h.bf16 %v211
        %v227 = vunpack.c.l.bf16 %v212
        %v228 = vunpack.c.h.bf16 %v212
        %v229 = vadd.f32 %v213, %v215
        %v230 = vadd.f32 %v229, %v217
        %v231 = vadd.f32 %v230, %v219
        %v232 = vadd.f32 %v231, %v221
        %v233 = vadd.f32 %v232, %v223
        %v234 = vadd.f32 %v233, %v225
        %v235 = vadd.f32 %v234, %v227
        %v236 = vadd.f32 %v214, %v216
        %v237 = vadd.f32 %v236, %v218
        %v238 = vadd.f32 %v237, %v220
        %v239 = vadd.f32 %v238, %v222
        %v240 = vadd.f32 %v239, %v224
        %v241 = vadd.f32 %v240, %v226
        %v242 = vadd.f32 %v241, %v228
        %v243 = vadd.f32 %v235, 0.0
        %v244 = vadd.f32 %v242, 0.0
        %s245 = scalar_lea.vmem %s177, 64 [#allocation2]
        %v246 = vld [vmem:[%s245] sm:$0xff]
        %v247 = vld [vmem:[%s245 + $0x8] sm:$0xff]
        %v248 = vld [vmem:[%s245 + $0x10] sm:$0xff]
        %v249 = vld [vmem:[%s245 + $0x18] sm:$0xff]
        %v250 = vld [vmem:[%s245 + $0x20] sm:$0xff]
        %v251 = vld [vmem:[%s245 + $0x28] sm:$0xff]
        %v252 = vld [vmem:[%s245 + $0x30] sm:$0xff]
        %v253 = vld [vmem:[%s245 + $0x38] sm:$0xff]
        %v254 = vunpack.c.l.bf16 %v246
        %v255 = vunpack.c.h.bf16 %v246
        %v256 = vunpack.c.l.bf16 %v247
        %v257 = vunpack.c.h.bf16 %v247
        %v258 = vunpack.c.l.bf16 %v248
        %v259 = vunpack.c.h.bf16 %v248
        %v260 = vunpack.c.l.bf16 %v249
        %v261 = vunpack.c.h.bf16 %v249
        %v262 = vunpack.c.l.bf16 %v250
        %v263 = vunpack.c.h.bf16 %v250
        %v264 = vunpack.c.l.bf16 %v251
        %v265 = vunpack.c.h.bf16 %v251
        %v266 = vunpack.c.l.bf16 %v252
        %v267 = vunpack.c.h.bf16 %v252
        %v268 = vunpack.c.l.bf16 %v253
        %v269 = vunpack.c.h.bf16 %v253
        %v270 = vadd.f32 %v254, %v256
        %v271 = vadd.f32 %v270, %v258
        %v272 = vadd.f32 %v271, %v260
        %v273 = vadd.f32 %v272, %v262
        %v274 = vadd.f32 %v273, %v264
        %v275 = vadd.f32 %v274, %v266
        %v276 = vadd.f32 %v275, %v268
        %v277 = vadd.f32 %v255, %v257
        %v278 = vadd.f32 %v277, %v259
        %v279 = vadd.f32 %v278, %v261
        %v280 = vadd.f32 %v279, %v263
        %v281 = vadd.f32 %v280, %v265
        %v282 = vadd.f32 %v281, %v267
        %v283 = vadd.f32 %v282, %v269
        %v284 = vadd.f32 %v243, %v276
        %v285 = vadd.f32 %v244, %v283
        %s286 = scalar_lea.vmem %s177, 128 [#allocation2]
        %v287 = vld [vmem:[%s286] sm:$0xff]
        %v288 = vld [vmem:[%s286 + $0x8] sm:$0xff]
        %v289 = vld [vmem:[%s286 + $0x10] sm:$0xff]
        %v290 = vld [vmem:[%s286 + $0x18] sm:$0xff]
        %v291 = vld [vmem:[%s286 + $0x20] sm:$0xff]
        %v292 = vld [vmem:[%s286 + $0x28] sm:$0xff]
        %v293 = vld [vmem:[%s286 + $0x30] sm:$0xff]
        %v294 = vld [vmem:[%s286 + $0x38] sm:$0xff]
        %v295 = vunpack.c.l.bf16 %v287
        %v296 = vunpack.c.h.bf16 %v287
        %v297 = vunpack.c.l.bf16 %v288
        %v298 = vunpack.c.h.bf16 %v288
        %v299 = vunpack.c.l.bf16 %v289
        %v300 = vunpack.c.h.bf16 %v289
        %v301 = vunpack.c.l.bf16 %v290
        %v302 = vunpack.c.h.bf16 %v290
        %v303 = vunpack.c.l.bf16 %v291
        %v304 = vunpack.c.h.bf16 %v291
        %v305 = vunpack.c.l.bf16 %v292
        %v306 = vunpack.c.h.bf16 %v292
        %v307 = vunpack.c.l.bf16 %v293
        %v308 = vunpack.c.h.bf16 %v293
        %v309 = vunpack.c.l.bf16 %v294
        %v310 = vunpack.c.h.bf16 %v294
        %v311 = vadd.f32 %v295, %v297
        %v312 = vadd.f32 %v311, %v299
        %v313 = vadd.f32 %v312, %v301
        %v314 = vadd.f32 %v313, %v303
        %v315 = vadd.f32 %v314, %v305
        %v316 = vadd.f32 %v315, %v307
        %v317 = vadd.f32 %v316, %v309
        %v318 = vadd.f32 %v296, %v298
        %v319 = vadd.f32 %v318, %v300
        %v320 = vadd.f32 %v319, %v302
        %v321 = vadd.f32 %v320, %v304
        %v322 = vadd.f32 %v321, %v306
        %v323 = vadd.f32 %v322, %v308
        %v324 = vadd.f32 %v323, %v310
        %v325 = vadd.f32 %v284, %v317
        %v326 = vadd.f32 %v285, %v324
        %s327 = scalar_lea.vmem %s177, 192 [#allocation2]
        %v328 = vld [vmem:[%s327] sm:$0xff]
        %v329 = vld [vmem:[%s327 + $0x8] sm:$0xff]
        %v330 = vld [vmem:[%s327 + $0x10] sm:$0xff]
        %v331 = vld [vmem:[%s327 + $0x18] sm:$0xff]
        %v332 = vld [vmem:[%s327 + $0x20] sm:$0xff]
        %v333 = vld [vmem:[%s327 + $0x28] sm:$0xff]
        %v334 = vld [vmem:[%s327 + $0x30] sm:$0xff]
        %v335 = vld [vmem:[%s327 + $0x38] sm:$0xff]
        %v336 = vunpack.c.l.bf16 %v328
        %v337 = vunpack.c.h.bf16 %v328
        %v338 = vunpack.c.l.bf16 %v329
        %v339 = vunpack.c.h.bf16 %v329
        %v340 = vunpack.c.l.bf16 %v330
        %v341 = vunpack.c.h.bf16 %v330
        %v342 = vunpack.c.l.bf16 %v331
        %v343 = vunpack.c.h.bf16 %v331
        %v344 = vunpack.c.l.bf16 %v332
        %v345 = vunpack.c.h.bf16 %v332
        %v346 = vunpack.c.l.bf16 %v333
        %v347 = vunpack.c.h.bf16 %v333
        %v348 = vunpack.c.l.bf16 %v334
        %v349 = vunpack.c.h.bf16 %v334
        %v350 = vunpack.c.l.bf16 %v335
        %v351 = vunpack.c.h.bf16 %v335
        %v352 = vadd.f32 %v336, %v338
        %v353 = vadd.f32 %v352, %v340
        %v354 = vadd.f32 %v353, %v342
        %v355 = vadd.f32 %v354, %v344
        %v356 = vadd.f32 %v355, %v346
        %v357 = vadd.f32 %v356, %v348
        %v358 = vadd.f32 %v357, %v350
        %v359 = vadd.f32 %v337, %v339
        %v360 = vadd.f32 %v359, %v341
        %v361 = vadd.f32 %v360, %v343
        %v362 = vadd.f32 %v361, %v345
        %v363 = vadd.f32 %v362, %v347
        %v364 = vadd.f32 %v363, %v349
        %v365 = vadd.f32 %v364, %v351
        %v366 = vadd.f32 %v325, %v358
        %v367 = vadd.f32 %v326, %v365
        %s368 = scalar_lea.vmem %s177, 256 [#allocation2]
        %v369 = vld [vmem:[%s368] sm:$0xff]
        %v370 = vld [vmem:[%s368 + $0x8] sm:$0xff]
        %v371 = vld [vmem:[%s368 + $0x10] sm:$0xff]
        %v372 = vld [vmem:[%s368 + $0x18] sm:$0xff]
        %v373 = vld [vmem:[%s368 + $0x20] sm:$0xff]
        %v374 = vld [vmem:[%s368 + $0x28] sm:$0xff]
        %v375 = vld [vmem:[%s368 + $0x30] sm:$0xff]
        %v376 = vld [vmem:[%s368 + $0x38] sm:$0xff]
        %v377 = vunpack.c.l.bf16 %v369
        %v378 = vunpack.c.h.bf16 %v369
        %v379 = vunpack.c.l.bf16 %v370
        %v380 = vunpack.c.h.bf16 %v370
        %v381 = vunpack.c.l.bf16 %v371
        %v382 = vunpack.c.h.bf16 %v371
        %v383 = vunpack.c.l.bf16 %v372
        %v384 = vunpack.c.h.bf16 %v372
        %v385 = vunpack.c.l.bf16 %v373
        %v386 = vunpack.c.h.bf16 %v373
        %v387 = vunpack.c.l.bf16 %v374
        %v388 = vunpack.c.h.bf16 %v374
        %v389 = vunpack.c.l.bf16 %v375
        %v390 = vunpack.c.h.bf16 %v375
        %v391 = vunpack.c.l.bf16 %v376
        %v392 = vunpack.c.h.bf16 %v376
        %v393 = vadd.f32 %v377, %v379
        %v394 = vadd.f32 %v393, %v381
        %v395 = vadd.f32 %v394, %v383
        %v396 = vadd.f32 %v395, %v385
        %v397 = vadd.f32 %v396, %v387
        %v398 = vadd.f32 %v397, %v389
        %v399 = vadd.f32 %v398, %v391
        %v400 = vadd.f32 %v378, %v380
        %v401 = vadd.f32 %v400, %v382
        %v402 = vadd.f32 %v401, %v384
        %v403 = vadd.f32 %v402, %v386
        %v404 = vadd.f32 %v403, %v388
        %v405 = vadd.f32 %v404, %v390
        %v406 = vadd.f32 %v405, %v392
        %v407 = vadd.f32 %v366, %v399
        %v408 = vadd.f32 %v367, %v406
        %s409 = scalar_lea.vmem %s177, 320 [#allocation2]
        %v410 = vld [vmem:[%s409] sm:$0xff]
        %v411 = vld [vmem:[%s409 + $0x8] sm:$0xff]
        %v412 = vld [vmem:[%s409 + $0x10] sm:$0xff]
        %v413 = vld [vmem:[%s409 + $0x18] sm:$0xff]
        %v414 = vld [vmem:[%s409 + $0x20] sm:$0xff]
        %v415 = vld [vmem:[%s409 + $0x28] sm:$0xff]
        %v416 = vld [vmem:[%s409 + $0x30] sm:$0xff]
        %v417 = vld [vmem:[%s409 + $0x38] sm:$0xff]
        %v418 = vunpack.c.l.bf16 %v410
        %v419 = vunpack.c.h.bf16 %v410
        %v420 = vunpack.c.l.bf16 %v411
        %v421 = vunpack.c.h.bf16 %v411
        %v422 = vunpack.c.l.bf16 %v412
        %v423 = vunpack.c.h.bf16 %v412
        %v424 = vunpack.c.l.bf16 %v413
        %v425 = vunpack.c.h.bf16 %v413
        %v426 = vunpack.c.l.bf16 %v414
        %v427 = vunpack.c.h.bf16 %v414
        %v428 = vunpack.c.l.bf16 %v415
        %v429 = vunpack.c.h.bf16 %v415
        %v430 = vunpack.c.l.bf16 %v416
        %v431 = vunpack.c.h.bf16 %v416
        %v432 = vunpack.c.l.bf16 %v417
        %v433 = vunpack.c.h.bf16 %v417
        %v434 = vadd.f32 %v418, %v420
        %v435 = vadd.f32 %v434, %v422
        %v436 = vadd.f32 %v435, %v424
        %v437 = vadd.f32 %v436, %v426
        %v438 = vadd.f32 %v437, %v428
        %v439 = vadd.f32 %v438, %v430
        %v440 = vadd.f32 %v439, %v432
        %v441 = vadd.f32 %v419, %v421
        %v442 = vadd.f32 %v441, %v423
        %v443 = vadd.f32 %v442, %v425
        %v444 = vadd.f32 %v443, %v427
        %v445 = vadd.f32 %v444, %v429
        %v446 = vadd.f32 %v445, %v431
        %v447 = vadd.f32 %v446, %v433
        %v448 = vadd.f32 %v407, %v440
        %v449 = vadd.f32 %v408, %v447
        %s450 = scalar_lea.vmem %s177, 384 [#allocation2]
        %v451 = vld [vmem:[%s450] sm:$0xff]
        %v452 = vld [vmem:[%s450 + $0x8] sm:$0xff]
        %v453 = vld [vmem:[%s450 + $0x10] sm:$0xff]
        %v454 = vld [vmem:[%s450 + $0x18] sm:$0xff]
        %v455 = vld [vmem:[%s450 + $0x20] sm:$0xff]
        %v456 = vld [vmem:[%s450 + $0x28] sm:$0xff]
        %v457 = vld [vmem:[%s450 + $0x30] sm:$0xff]
        %v458 = vld [vmem:[%s450 + $0x38] sm:$0xff]
        %v459 = vunpack.c.l.bf16 %v451
        %v460 = vunpack.c.h.bf16 %v451
        %v461 = vunpack.c.l.bf16 %v452
        %v462 = vunpack.c.h.bf16 %v452
        %v463 = vunpack.c.l.bf16 %v453
        %v464 = vunpack.c.h.bf16 %v453
        %v465 = vunpack.c.l.bf16 %v454
        %v466 = vunpack.c.h.bf16 %v454
        %v467 = vunpack.c.l.bf16 %v455
        %v468 = vunpack.c.h.bf16 %v455
        %v469 = vunpack.c.l.bf16 %v456
        %v470 = vunpack.c.h.bf16 %v456
        %v471 = vunpack.c.l.bf16 %v457
        %v472 = vunpack.c.h.bf16 %v457
        %v473 = vunpack.c.l.bf16 %v458
        %v474 = vunpack.c.h.bf16 %v458
        %v475 = vadd.f32 %v459, %v461
        %v476 = vadd.f32 %v475, %v463
        %v477 = vadd.f32 %v476, %v465
        %v478 = vadd.f32 %v477, %v467
        %v479 = vadd.f32 %v478, %v469
        %v480 = vadd.f32 %v479, %v471
        %v481 = vadd.f32 %v480, %v473
        %v482 = vadd.f32 %v460, %v462
        %v483 = vadd.f32 %v482, %v464
        %v484 = vadd.f32 %v483, %v466
        %v485 = vadd.f32 %v484, %v468
        %v486 = vadd.f32 %v485, %v470
        %v487 = vadd.f32 %v486, %v472
        %v488 = vadd.f32 %v487, %v474
        %v489 = vadd.f32 %v448, %v481
        %v490 = vadd.f32 %v449, %v488
        %s491 = scalar_lea.vmem %s177, 448 [#allocation2]
        %v492 = vld [vmem:[%s491] sm:$0xff]
        %v493 = vld [vmem:[%s491 + $0x8] sm:$0xff]
        %v494 = vld [vmem:[%s491 + $0x10] sm:$0xff]
        %v495 = vld [vmem:[%s491 + $0x18] sm:$0xff]
        %v496 = vld [vmem:[%s491 + $0x20] sm:$0xff]
        %v497 = vld [vmem:[%s491 + $0x28] sm:$0xff]
        %v498 = vld [vmem:[%s491 + $0x30] sm:$0xff]
        %v499 = vld [vmem:[%s491 + $0x38] sm:$0xff]
        %v500 = vunpack.c.l.bf16 %v492
        %v501 = vunpack.c.h.bf16 %v492
        %v502 = vunpack.c.l.bf16 %v493
        %v503 = vunpack.c.h.bf16 %v493
        %v504 = vunpack.c.l.bf16 %v494
        %v505 = vunpack.c.h.bf16 %v494
        %v506 = vunpack.c.l.bf16 %v495
        %v507 = vunpack.c.h.bf16 %v495
        %v508 = vunpack.c.l.bf16 %v496
        %v509 = vunpack.c.h.bf16 %v496
        %v510 = vunpack.c.l.bf16 %v497
        %v511 = vunpack.c.h.bf16 %v497
        %v512 = vunpack.c.l.bf16 %v498
        %v513 = vunpack.c.h.bf16 %v498
        %v514 = vunpack.c.l.bf16 %v499
        %v515 = vunpack.c.h.bf16 %v499
        %v516 = vadd.f32 %v500, %v502
        %v517 = vadd.f32 %v516, %v504
        %v518 = vadd.f32 %v517, %v506
        %v519 = vadd.f32 %v518, %v508
        %v520 = vadd.f32 %v519, %v510
        %v521 = vadd.f32 %v520, %v512
        %v522 = vadd.f32 %v521, %v514
        %v523 = vadd.f32 %v501, %v503
        %v524 = vadd.f32 %v523, %v505
        %v525 = vadd.f32 %v524, %v507
        %v526 = vadd.f32 %v525, %v509
        %v527 = vadd.f32 %v526, %v511
        %v528 = vadd.f32 %v527, %v513
        %v529 = vadd.f32 %v528, %v515
        %v530 = vadd.f32 %v489, %v522
        %v531 = vadd.f32 %v490, %v529
        %v532 = vpack.c.bf16 %v530, %v530
        %v533 = vpack.c.bf16 %v531, %v531
        %v534 = vld [vmem:[#allocation5] sm:$0xf]
        %v535 = vld [vmem:[#allocation5 + $0x4] sm:$0xf]
        %v536 = vld [vmem:[#allocation5 + $0x8] sm:$0xf]
        %v537 = vld [vmem:[#allocation5 + $0xc] sm:$0xf]
        %v538 = vld [vmem:[#allocation5 + $0x10] sm:$0xf]
        %v539 = vld [vmem:[#allocation5 + $0x14] sm:$0xf]
        %v540 = vld [vmem:[#allocation5 + $0x18] sm:$0xf]
        %v541 = vld [vmem:[#allocation5 + $0x1c] sm:$0xf]
        %v542 = vld [vmem:[#allocation5 + $0x20] sm:$0xf]
        %v543 = vld [vmem:[#allocation5 + $0x24] sm:$0xf]
        %v544 = vld [vmem:[#allocation5 + $0x28] sm:$0xf]
        %v545 = vld [vmem:[#allocation5 + $0x2c] sm:$0xf]
        %v546 = vld [vmem:[#allocation5 + $0x30] sm:$0xf]
        %v547 = vld [vmem:[#allocation5 + $0x34] sm:$0xf]
        %v548 = vld [vmem:[#allocation5 + $0x38] sm:$0xf]
        %v549 = vld [vmem:[#allocation5 + $0x3c] sm:$0xf]
        %v550 = vld [vmem:[#allocation5 + $0x40] sm:$0xf]
        %v551 = vld [vmem:[#allocation5 + $0x44] sm:$0xf]
        %v552 = vld [vmem:[#allocation5 + $0x48] sm:$0xf]
        %v553 = vld [vmem:[#allocation5 + $0x4c] sm:$0xf]
        %v554 = vld [vmem:[#allocation5 + $0x50] sm:$0xf]
        %v555 = vld [vmem:[#allocation5 + $0x54] sm:$0xf]
        %v556 = vld [vmem:[#allocation5 + $0x58] sm:$0xf]
        %v557 = vld [vmem:[#allocation5 + $0x5c] sm:$0xf]
        %v558 = vld [vmem:[#allocation5 + $0x60] sm:$0xf]
        %v559 = vld [vmem:[#allocation5 + $0x64] sm:$0xf]
        %v560 = vld [vmem:[#allocation5 + $0x68] sm:$0xf]
        %v561 = vld [vmem:[#allocation5 + $0x6c] sm:$0xf]
        %v562 = vld [vmem:[#allocation5 + $0x70] sm:$0xf]
        %v563 = vld [vmem:[#allocation5 + $0x74] sm:$0xf]
        %v564 = vld [vmem:[#allocation5 + $0x78] sm:$0xf]
        %v565 = vld [vmem:[#allocation5 + $0x7c] sm:$0xf]
        %v566 = vld [vmem:[%s2] sm:$0x1]
        %v568 = vlaneseq
        %v569 = vshrl.u32 %v568, 7
        %v570 = vsub.s32 0, %v569
        %v571 = vrot.slane %v566, %v570
        %v605 = vunpack.c.l.b16 %v534
        %v606 = vunpack.c.l.b16 %v535
        %v607 = vunpack.c.l.b16 %v536
        %v608 = vunpack.c.l.b16 %v537
        %v609 = vunpack.c.l.b16 %v538
        %v610 = vunpack.c.l.b16 %v539
        %v611 = vunpack.c.l.b16 %v540
        %v612 = vunpack.c.l.b16 %v541
        %v613 = vunpack.c.l.b16 %v542
        %v614 = vunpack.c.l.b16 %v543
        %v615 = vunpack.c.l.b16 %v544
        %v616 = vunpack.c.l.b16 %v545
        %v617 = vunpack.c.l.b16 %v546
        %v618 = vunpack.c.l.b16 %v547
        %v619 = vunpack.c.l.b16 %v548
        %v620 = vunpack.c.l.b16 %v549
        %v621 = vunpack.c.l.b16 %v550
        %v622 = vunpack.c.l.b16 %v551
        %v623 = vunpack.c.l.b16 %v552
        %v624 = vunpack.c.l.b16 %v553
        %v625 = vunpack.c.l.b16 %v554
        %v626 = vunpack.c.l.b16 %v555
        %v627 = vunpack.c.l.b16 %v556
        %v628 = vunpack.c.l.b16 %v557
        %v629 = vunpack.c.l.b16 %v558
        %v630 = vunpack.c.l.b16 %v559
        %v631 = vunpack.c.l.b16 %v560
        %v632 = vunpack.c.l.b16 %v561
        %v633 = vunpack.c.l.b16 %v562
        %v634 = vunpack.c.l.b16 %v563
        %v635 = vunpack.c.l.b16 %v564
        %v636 = vunpack.c.l.b16 %v565
        %v637 = vpack.c.b16 %v606, %v605
        %v638 = vpack.c.b16 %v608, %v607
        %v639 = vpack.c.b16 %v610, %v609
        %v640 = vpack.c.b16 %v612, %v611
        %v641 = vpack.c.b16 %v614, %v613
        %v642 = vpack.c.b16 %v616, %v615
        %v643 = vpack.c.b16 %v618, %v617
        %v644 = vpack.c.b16 %v620, %v619
        %v645 = vpack.c.b16 %v622, %v621
        %v646 = vpack.c.b16 %v624, %v623
        %v647 = vpack.c.b16 %v626, %v625
        %v648 = vpack.c.b16 %v628, %v627
        %v649 = vpack.c.b16 %v630, %v629
        %v650 = vpack.c.b16 %v632, %v631
        %v651 = vpack.c.b16 %v634, %v633
        %v652 = vpack.c.b16 %v636, %v635
        %669 = vmatprep.subr.bf16.mxu0 0
        %670 = vmatpush1.bf16.msra.mxu0 %v637
        %671 = vmatprep.subr.bf16.mxu0 0
        %672 = vmatpush1.bf16.msra.mxu0 %v638
        %673 = vmatprep.subr.bf16.mxu0 0
        %674 = vmatpush1.bf16.msra.mxu0 %v639
        %675 = vmatprep.subr.bf16.mxu0 0
        %676 = vmatpush1.bf16.msra.mxu0 %v640
        %677 = vmatprep.subr.bf16.mxu0 0
        %678 = vmatpush1.bf16.msra.mxu0 %v641
        %679 = vmatprep.subr.bf16.mxu0 0
        %680 = vmatpush1.bf16.msra.mxu0 %v642
        %681 = vmatprep.subr.bf16.mxu0 0
        %682 = vmatpush1.bf16.msra.mxu0 %v643
        %683 = vmatprep.subr.bf16.mxu0 0
        %684 = vmatpush1.bf16.msra.mxu0 %v644
        %685 = vmatprep.subr.bf16.mxu0 0
        %686 = vmatpush1.bf16.msra.mxu0 %v645
        %687 = vmatprep.subr.bf16.mxu0 0
        %688 = vmatpush1.bf16.msra.mxu0 %v646
        %689 = vmatprep.subr.bf16.mxu0 0
        %690 = vmatpush1.bf16.msra.mxu0 %v647
        %691 = vmatprep.subr.bf16.mxu0 0
        %692 = vmatpush1.bf16.msra.mxu0 %v648
        %693 = vmatprep.subr.bf16.mxu0 0
        %694 = vmatpush1.bf16.msra.mxu0 %v649
        %695 = vmatprep.subr.bf16.mxu0 0
        %696 = vmatpush1.bf16.msra.mxu0 %v650
        %697 = vmatprep.subr.bf16.mxu0 0
        %698 = vmatpush1.bf16.msra.mxu0 %v651
        %699 = vmatprep.subr.bf16.mxu0 0
        %700 = vmatpush1.bf16.msra.mxu0 %v652
        %701 = vmatprep.mubr.bf16.mxu0 %v533
        %702 = vmatmul.mubr.bf16.gmra.mrb[0].mxu0 %v532
        %v703 = vpop.f32.mrb[0].mxu0
        %v704 = vadd.f32 %v571, %v703
        %v705 = vpop.f32.mrb[0].mxu0
        %v706 = vpop.f32.mrb[0].mxu0
        %v707 = vpop.f32.mrb[0].mxu0
        %708 = vdwg.mxu0
        %709 = vst [vmem:[%s203] sm:$0xff] %v704
        %s710 = sand.u32 %s97, 1
        %s711 = scalar_lea.sflag [#allocation4], %s710
        %s712 = sand.u32 %s97, 1
        %s713 = smul.addr %s712, 8
        %s714 = scalar_lea.vmem [#allocation7], %s713
        // Predicated region
        $region41: #{tpu_custom_call.1} parent=31 // pred_check
          %p715 = pneg %p107
        $region42: #{tpu_custom_call.1} parent=31 // pred_check_branch
          %717 = sbr.rel (%p715) target = $region44
        $region43: #{tpu_custom_call.1} parent=31 // pred_region
          %s719 = ssub.s32 128, 128
          %720 = vsyncadd %s711, %s719
          %s721 = smul.addr %s21, 128
          %s722 = scalar_lea.hbm %s3, %s721
          %s724 = sshll.u32 %s714, 4
          %s725 = int_to_ptr.vmem [resolvable:$true] %s724
          %727 = dma.vmem_to_hbm [thread:$0]  %s725, 128, %s722, %s711
        $region44: #{tpu_custom_call.1} parent=31 // pred_fallthru
          _
      $region32: #{tpu_custom_call.1} parent=5 // pred_fallthru
        _
      %p728 = scmp.le.s32.totalorder 2, %s16
      // Predicated region
      $region45: #{tpu_custom_call.1} parent=5 // pred_check
        %p729 = pneg %p728
      $region46: #{tpu_custom_call.1} parent=5 // pred_check_branch
        %731 = sbr.rel (%p729) target = $region48
      $region47: #{tpu_custom_call.1} parent=5 // pred_region
        %s732 = ssub.s32 %s16, 2
        // Predicated region
        $region49: #{tpu_custom_call.1} parent=47 // pred_check
          %p733 = pneg %p113
        $region50: #{tpu_custom_call.1} parent=47 // pred_check_branch
          %735 = sbr.rel (%p733) target = $region52
        $region51: #{tpu_custom_call.1} parent=47 // pred_region
          %s736 = sand.u32 %s98, 1
          %s737 = scalar_lea.sflag [#allocation4], %s736
          %s738 = sand.u32 %s98, 1
          %s739 = smul.addr %s738, 8
          %s740 = scalar_lea.vmem [#allocation7], %s739
          %741 = dma.done %s737, 128
        $region52: #{tpu_custom_call.1} parent=47 // pred_fallthru
          _
      $region48: #{tpu_custom_call.1} parent=5 // pred_fallthru
        _
    $region6: #{tpu_custom_call.1} parent=1 // loop_footer
      %s20 = sadd.s32 1, %s16
    $region7: #{tpu_custom_call.1} parent=1 // loop_footer_branch
      %15 = sbr.rel target = $region3
    $region8: #{tpu_custom_call.1} parent=1 // loop_exit
      _
    %742 = vsyncpa [#allocation3], 1
    %s743 = scalar_lea.sflag [#allocation3], 1
    %744 = vsyncpa %s743, 1
    %745 = vsyncpa [#allocation6], 1
    %746 = vsyncpa [#allocation4], 1
    %s747 = scalar_lea.sflag [#allocation4], 1
    %748 = vsyncpa %s747, 1

</llo_original>
